<compile_context>
chip_gen: v7x
topology: tpu7x:2x2x1
jax: 0.10.0
libtpu: 0.0.40
codegen_flags: <defaults>
</compile_context>

<pallas_src>
import functools

import jax
import jax.numpy as jnp
from jax.experimental import pallas as pl
from jax.experimental.pallas import tpu as pltpu


def _round_up(x: int, m: int) -> int:
    return (x + m - 1) // m * m


def _linear_bias_relu_kernel(x_ref, w_ref, b_ref, o_ref, acc_ref):
    """Computes one (tm, tn) output tile of relu(X @ W + b).

    Grid: (M//tm, N//tn, K//tk); axis 2 is the K reduction.
      x_ref: (tm, tk), w_ref: (tk, tn), b_ref: (1, tn),
      o_ref: (tm, tn), acc_ref: VMEM (tm, tn) f32 accumulator.
    """
    k = pl.program_id(2)

    @pl.when(k == 0)
    def _init():
        acc_ref[...] = jnp.zeros_like(acc_ref)

    acc_ref[...] += jnp.dot(
        x_ref[...], w_ref[...], preferred_element_type=jnp.float32
    )

    # Bias + ReLU only once, on the final partial sum.
    @pl.when(k == pl.num_programs(2) - 1)
    def _epilogue():
        y = acc_ref[...] + b_ref[...]                # (tm, tn) + (1, tn)
        o_ref[...] = jnp.maximum(y, 0.0).astype(o_ref.dtype)


@functools.partial(jax.jit, static_argnames=("tm", "tn", "tk"))
def mylinear_forward(x, weight, bias, *, tm=128, tn=128, tk=128):
    """relu(x @ weight + bias) via a 3-D tiled Pallas TPU GEMM kernel."""
    M, K = x.shape
    K2, N = weight.shape
    assert K == K2, f"x and weight contraction dims differ: {K} vs {K2}"
    assert bias.shape == (N,)
    assert tn % 128 == 0 and tm % 8 == 0, "tiles must be (8,128)-aligned"

    # Pad to lane/sublane-dense tile multiples; zero padding keeps the matmul,
    # bias-add and ReLU exact on the valid region (sliced off at the end).
    Mp, Kp, Np = _round_up(M, tm), _round_up(K, tk), _round_up(N, tn)
    x_p = jnp.pad(x.astype(jnp.float32), ((0, Mp - M), (0, Kp - K)))
    w_p = jnp.pad(weight.astype(jnp.float32), ((0, Kp - K), (0, Np - N)))
    b_p = jnp.pad(bias.astype(jnp.float32), (0, Np - N)).reshape(1, Np)

    grid = (Mp // tm, Np // tn, Kp // tk)

    out_p = pl.pallas_call(
        _linear_bias_relu_kernel,
        out_shape=jax.ShapeDtypeStruct((Mp, Np), jnp.float32),
        grid_spec=pltpu.PrefetchScalarGridSpec(
            num_scalar_prefetch=0,
            grid=grid,
            in_specs=[
                pl.BlockSpec((tm, tk), lambda i, j, k: (i, k)),   # X tile
                pl.BlockSpec((tk, tn), lambda i, j, k: (k, j)),   # W tile
                pl.BlockSpec((1, tn), lambda i, j, k: (0, j)),    # bias tile
            ],
            out_specs=pl.BlockSpec((tm, tn), lambda i, j, k: (i, j)),
            scratch_shapes=[pltpu.VMEM((tm, tn), jnp.float32)],
        ),
        compiler_params=pltpu.CompilerParams(
            dimension_semantics=("parallel", "parallel", "arbitrary"),
        ),
    )(x_p, w_p, b_p)

    return out_p[:M, :N]


def _reference(x, weight, bias):
    return jnp.maximum(x @ weight + bias, 0.0)


if __name__ == "__main__":
    key = jax.random.PRNGKey(0)

    # 1) The literal module config: MyLinear(5, 3), batch=4 (padded to one tile).
    in_units, units, batch = 5, 3, 4
    kx, kw, kb, kx2, kw2, kb2 = jax.random.split(key, 6)
    x = jax.random.normal(kx, (batch, in_units), dtype=jnp.float32)
    w = jax.random.normal(kw, (in_units, units), dtype=jnp.float32)
    b = jax.random.normal(kb, (units,), dtype=jnp.float32)

    out = jax.block_until_ready(mylinear_forward(x, w, b))
    ref = _reference(x, w, b)
    assert out.shape == (batch, units)
    assert jnp.allclose(out, ref, atol=1e-5, rtol=1e-5)

    # 2) A larger config exercising a real (2, 2, 3) grid + K-tiled accumulator.
    M2, K2, N2 = 256, 384, 256
    x2 = jax.random.normal(kx2, (M2, K2), dtype=jnp.float32)
    w2 = jax.random.normal(kw2, (K2, N2), dtype=jnp.float32)
    b2 = jax.random.normal(kb2, (N2,), dtype=jnp.float32)

    out2 = jax.block_until_ready(mylinear_forward(x2, w2, b2))
    ref2 = _reference(x2, w2, b2)
    assert out2.shape == (M2, N2)
    assert jnp.allclose(out2, ref2, atol=1e-4, rtol=1e-4)

    print("KERNEL_OK")
</pallas_src>

<mosaic_0001>
module attributes {stable_mosaic.version = 11 : i64} {
  func.func @_linear_bias_relu_kernel(%arg0: i32, %arg1: i32, %arg2: i32, %arg3: memref<128x128xf32, #tpu.memory_space<vmem>>, %arg4: memref<128x128xf32, #tpu.memory_space<vmem>>, %arg5: memref<1x128xf32, #tpu.memory_space<vmem>>, %arg6: memref<128x128xf32, #tpu.memory_space<vmem>>, %arg7: memref<128x128xf32, #tpu.memory_space<vmem>>) attributes {dimension_semantics = [#tpu.dimension_semantics<parallel>, #tpu.dimension_semantics<parallel>, #tpu.dimension_semantics<arbitrary>], iteration_bounds = array<i64: 1, 1, 1>, scalar_prefetch = 0 : i64, scratch_operands = 1 : i64, tpu.core_type = #tpu.core_type<tc>, window_params = [{transform_indices = @transform_0, window_bounds = array<i64: 128, 128>}, {transform_indices = @transform_1, window_bounds = array<i64: 128, 128>}, {transform_indices = @transform_2, window_bounds = array<i64: 1, 128>}, {transform_indices = @transform_3, window_bounds = array<i64: 128, 128>}]} {
    %c0_i32 = arith.constant 0 : i32
    %0 = arith.cmpi eq, %arg2, %c0_i32 : i32
    %1 = arith.extui %0 : i1 to i32
    %c0_i32_0 = arith.constant 0 : i32
    %2 = arith.cmpi ne, %1, %c0_i32_0 : i32
    scf.if %2 {
      %cst_10 = arith.constant 0.000000e+00 : f32
      %12 = vector.broadcast %cst_10 : f32 to vector<128x128xf32>
      %c0_11 = arith.constant 0 : index
      %c0_12 = arith.constant 0 : index
      %13 = vector.load %arg7[%c0_11, %c0_12] : memref<128x128xf32, #tpu.memory_space<vmem>>, vector<128x128xf32>
      tpu.vector_store %arg7[%c0_11, %c0_12], %12 {strides = array<i32>} : memref<128x128xf32, #tpu.memory_space<vmem>>, vector<128x128xf32>,
    } else {
    }
    %c0 = arith.constant 0 : index
    %c0_1 = arith.constant 0 : index
    %3 = vector.load %arg7[%c0, %c0_1] : memref<128x128xf32, #tpu.memory_space<vmem>>, vector<128x128xf32>
    %c0_2 = arith.constant 0 : index
    %c0_3 = arith.constant 0 : index
    %4 = vector.load %arg3[%c0_2, %c0_3] : memref<128x128xf32, #tpu.memory_space<vmem>>, vector<128x128xf32>
    %c0_4 = arith.constant 0 : index
    %c0_5 = arith.constant 0 : index
    %5 = vector.load %arg4[%c0_4, %c0_5] : memref<128x128xf32, #tpu.memory_space<vmem>>, vector<128x128xf32>
    %cst = arith.constant dense<0.000000e+00> : vector<128x128xf32>
    %6 = tpu.matmul %4, %5, %cst {dimension_numbers = #tpu.dot_dimension_numbers<[1], [0], [0], [1], [0, 0, 1, 1], [], []>} : vector<128x128xf32>, vector<128x128xf32>, vector<128x128xf32> -> vector<128x128xf32>
    %7 = arith.addf %3, %6 : vector<128x128xf32>
    %c0_6 = arith.constant 0 : index
    %c0_7 = arith.constant 0 : index
    %8 = vector.load %arg7[%c0_6, %c0_7] : memref<128x128xf32, #tpu.memory_space<vmem>>, vector<128x128xf32>
    tpu.vector_store %arg7[%c0_6, %c0_7], %7 {strides = array<i32>} : memref<128x128xf32, #tpu.memory_space<vmem>>, vector<128x128xf32>,
    %c0_i32_8 = arith.constant 0 : i32
    %9 = arith.cmpi eq, %arg2, %c0_i32_8 : i32
    %10 = arith.extui %9 : i1 to i32
    %c0_i32_9 = arith.constant 0 : i32
    %11 = arith.cmpi ne, %10, %c0_i32_9 : i32
    scf.if %11 {
      %c0_10 = arith.constant 0 : index
      %c0_11 = arith.constant 0 : index
      %12 = vector.load %arg7[%c0_10, %c0_11] : memref<128x128xf32, #tpu.memory_space<vmem>>, vector<128x128xf32>
      %c0_12 = arith.constant 0 : index
      %c0_13 = arith.constant 0 : index
      %13 = vector.load %arg5[%c0_12, %c0_13] : memref<1x128xf32, #tpu.memory_space<vmem>>, vector<1x128xf32>
      %14 = vector.broadcast %13 : vector<1x128xf32> to vector<128x128xf32>
      %15 = arith.addf %12, %14 : vector<128x128xf32>
      %cst_14 = arith.constant 0.000000e+00 : f32
      %16 = vector.broadcast %cst_14 : f32 to vector<128x128xf32>
      %17 = arith.maximumf %15, %16 : vector<128x128xf32>
      %c0_15 = arith.constant 0 : index
      %c0_16 = arith.constant 0 : index
      %18 = vector.load %arg6[%c0_15, %c0_16] : memref<128x128xf32, #tpu.memory_space<vmem>>, vector<128x128xf32>
      tpu.vector_store %arg6[%c0_15, %c0_16], %17 {strides = array<i32>} : memref<128x128xf32, #tpu.memory_space<vmem>>, vector<128x128xf32>,
    } else {
    }
    return
  }
  func.func @transform_0(%arg0: i32, %arg1: i32, %arg2: i32) -> (i32, i32) {
    %c0_i32 = arith.constant 0 : i32
    return %arg0, %arg2 : i32, i32
  }
  func.func @transform_1(%arg0: i32, %arg1: i32, %arg2: i32) -> (i32, i32) {
    %c0_i32 = arith.constant 0 : i32
    return %arg2, %arg1 : i32, i32
  }
  func.func @transform_2(%arg0: i32, %arg1: i32, %arg2: i32) -> (i32, i32) {
    %c0_i32 = arith.constant 0 : i32
    %c0_i32_0 = arith.constant 0 : i32
    return %c0_i32, %arg1 : i32, i32
  }
  func.func @transform_3(%arg0: i32, %arg1: i32, %arg2: i32) -> (i32, i32) {
    %c0_i32 = arith.constant 0 : i32
    return %arg0, %arg1 : i32, i32
  }
}

</mosaic_0001>

<llo_original>
// kernel: mylinear_forward.1
$region0: #{mylinear_forward.1}
  #allocation0 [shape = 'u32[]', space=smem, size = 0x4, offset = 0x4, fixed_abs, tag = 'smem constant byte address 0x4 - core index']
  #allocation1 [shape = 'u32[144,128]{1,0:T(1,128)}', space=vmem, size = 0x12000, scoped, tag = 'internal scratch']
  #allocation2 [shape = 'f32[128,128]{1,0:T(8,128)}', space=vmem, size = 0x10000, scoped, tag = 'scratch operand']
  %s0 = inlined_call_operand.vmem [shape: f32[128,128], index: 0, kind: input, shape index: {}]
  %s1 = inlined_call_operand.vmem [shape: f32[128,128], index: 1, kind: input, shape index: {}]
  %s2 = inlined_call_operand.vmem [shape: f32[1,128], index: 2, kind: input, shape index: {}]
  %s3 = inlined_call_operand.vmem [shape: f32[128,128], index: 3, kind: output, shape index: {}]
  %s4 = sld [smem:[#allocation0]]
  $region30: #{mylinear_forward.1} parent=0
    _
  %s6 = ssub.s32 1, %s4
  %s7 = scalar_select 0, %s6, %s4
  // Predicated region
  $region2: #{mylinear_forward.1} parent=0 // pred_check
    _
  $region3: #{mylinear_forward.1} parent=0 // pred_check_branch
    %9 = sbr.rel (0) target = $region5
  $region4: #{mylinear_forward.1} parent=0 // pred_region
    _
  $region5: #{mylinear_forward.1} parent=0 // pred_fallthru
    _
  // Predicated region
  $region6: #{mylinear_forward.1} parent=0 // pred_check
    _
  $region7: #{mylinear_forward.1} parent=0 // pred_check_branch
    %11 = sbr.rel (0) target = $region9
  $region8: #{mylinear_forward.1} parent=0 // pred_region
    _
  $region9: #{mylinear_forward.1} parent=0 // pred_fallthru
    _
  // Predicated region
  $region10: #{mylinear_forward.1} parent=0 // pred_check
    _
  $region11: #{mylinear_forward.1} parent=0 // pred_check_branch
    %13 = sbr.rel (0) target = $region13
  $region12: #{mylinear_forward.1} parent=0 // pred_region
    _
  $region13: #{mylinear_forward.1} parent=0 // pred_fallthru
    _
  %p14 = scmp.eq.s32.totalorder 0, 0
  // Predicated region
  $region14: #{mylinear_forward.1} parent=0 // pred_check
    %p15 = pneg %p14
  $region15: #{mylinear_forward.1} parent=0 // pred_check_branch
    %17 = sbr.rel (%p15) target = $region17
  $region16: #{mylinear_forward.1} parent=0 // pred_region
    %18 = vst [vmem:[#allocation2] sm:$0xff] 0.0
    %19 = vst [vmem:[#allocation2 + $0x8] sm:$0xff] 0.0
    %20 = vst [vmem:[#allocation2 + $0x10] sm:$0xff] 0.0
    %21 = vst [vmem:[#allocation2 + $0x18] sm:$0xff] 0.0
    %22 = vst [vmem:[#allocation2 + $0x20] sm:$0xff] 0.0
    %23 = vst [vmem:[#allocation2 + $0x28] sm:$0xff] 0.0
    %24 = vst [vmem:[#allocation2 + $0x30] sm:$0xff] 0.0
    %25 = vst [vmem:[#allocation2 + $0x38] sm:$0xff] 0.0
    %26 = vst [vmem:[#allocation2 + $0x40] sm:$0xff] 0.0
    %27 = vst [vmem:[#allocation2 + $0x48] sm:$0xff] 0.0
    %28 = vst [vmem:[#allocation2 + $0x50] sm:$0xff] 0.0
    %29 = vst [vmem:[#allocation2 + $0x58] sm:$0xff] 0.0
    %30 = vst [vmem:[#allocation2 + $0x60] sm:$0xff] 0.0
    %31 = vst [vmem:[#allocation2 + $0x68] sm:$0xff] 0.0
    %32 = vst [vmem:[#allocation2 + $0x70] sm:$0xff] 0.0
    %33 = vst [vmem:[#allocation2 + $0x78] sm:$0xff] 0.0
  $region17: #{mylinear_forward.1} parent=0 // pred_fallthru
    _
  %v34 = vld [vmem:[#allocation2] sm:$0xff]
  %v35 = vld [vmem:[#allocation2 + $0x8] sm:$0xff]
  %v36 = vld [vmem:[#allocation2 + $0x10] sm:$0xff]
  %v37 = vld [vmem:[#allocation2 + $0x18] sm:$0xff]
  %v38 = vld [vmem:[#allocation2 + $0x20] sm:$0xff]
  %v39 = vld [vmem:[#allocation2 + $0x28] sm:$0xff]
  %v40 = vld [vmem:[#allocation2 + $0x30] sm:$0xff]
  %v41 = vld [vmem:[#allocation2 + $0x38] sm:$0xff]
  %v42 = vld [vmem:[#allocation2 + $0x40] sm:$0xff]
  %v43 = vld [vmem:[#allocation2 + $0x48] sm:$0xff]
  %v44 = vld [vmem:[#allocation2 + $0x50] sm:$0xff]
  %v45 = vld [vmem:[#allocation2 + $0x58] sm:$0xff]
  %v46 = vld [vmem:[#allocation2 + $0x60] sm:$0xff]
  %v47 = vld [vmem:[#allocation2 + $0x68] sm:$0xff]
  %v48 = vld [vmem:[#allocation2 + $0x70] sm:$0xff]
  %v49 = vld [vmem:[#allocation2 + $0x78] sm:$0xff]
  %v50 = vld [vmem:[%s0] sm:$0xff]
  %v51 = vld [vmem:[%s0 + $0x8] sm:$0xff]
  %v52 = vld [vmem:[%s0 + $0x10] sm:$0xff]
  %v53 = vld [vmem:[%s0 + $0x18] sm:$0xff]
  %v54 = vld [vmem:[%s0 + $0x20] sm:$0xff]
  %v55 = vld [vmem:[%s0 + $0x28] sm:$0xff]
  %v56 = vld [vmem:[%s0 + $0x30] sm:$0xff]
  %v57 = vld [vmem:[%s0 + $0x38] sm:$0xff]
  %v58 = vld [vmem:[%s0 + $0x40] sm:$0xff]
  %v59 = vld [vmem:[%s0 + $0x48] sm:$0xff]
  %v60 = vld [vmem:[%s0 + $0x50] sm:$0xff]
  %v61 = vld [vmem:[%s0 + $0x58] sm:$0xff]
  %v62 = vld [vmem:[%s0 + $0x60] sm:$0xff]
  %v63 = vld [vmem:[%s0 + $0x68] sm:$0xff]
  %v64 = vld [vmem:[%s0 + $0x70] sm:$0xff]
  %v65 = vld [vmem:[%s0 + $0x78] sm:$0xff]
  %v66 = vld [vmem:[%s1] sm:$0xff]
  %v67 = vld [vmem:[%s1 + $0x8] sm:$0xff]
  %v68 = vld [vmem:[%s1 + $0x10] sm:$0xff]
  %v69 = vld [vmem:[%s1 + $0x18] sm:$0xff]
  %v70 = vld [vmem:[%s1 + $0x20] sm:$0xff]
  %v71 = vld [vmem:[%s1 + $0x28] sm:$0xff]
  %v72 = vld [vmem:[%s1 + $0x30] sm:$0xff]
  %v73 = vld [vmem:[%s1 + $0x38] sm:$0xff]
  %v74 = vld [vmem:[%s1 + $0x40] sm:$0xff]
  %v75 = vld [vmem:[%s1 + $0x48] sm:$0xff]
  %v76 = vld [vmem:[%s1 + $0x50] sm:$0xff]
  %v77 = vld [vmem:[%s1 + $0x58] sm:$0xff]
  %v78 = vld [vmem:[%s1 + $0x60] sm:$0xff]
  %v79 = vld [vmem:[%s1 + $0x68] sm:$0xff]
  %v80 = vld [vmem:[%s1 + $0x70] sm:$0xff]
  %v81 = vld [vmem:[%s1 + $0x78] sm:$0xff]
  %82 = vmatprep.subr.mxu0 0.0
  %83 = vmatpush1.msra.mxu0 %v66
  %84 = vmatprep.subr.mxu0 0.0
  %85 = vmatpush1.msra.mxu0 %v67
  %86 = vmatprep.subr.mxu0 0.0
  %87 = vmatpush1.msra.mxu0 %v68
  %88 = vmatprep.subr.mxu0 0.0
  %89 = vmatpush1.msra.mxu0 %v69
  %90 = vmatprep.subr.mxu0 0.0
  %91 = vmatpush1.msra.mxu0 %v70
  %92 = vmatprep.subr.mxu0 0.0
  %93 = vmatpush1.msra.mxu0 %v71
  %94 = vmatprep.subr.mxu0 0.0
  %95 = vmatpush1.msra.mxu0 %v72
  %96 = vmatprep.subr.mxu0 0.0
  %97 = vmatpush1.msra.mxu0 %v73
  %98 = vmatprep.subr.mxu0 0.0
  %99 = vmatpush1.msra.mxu0 %v74
  %100 = vmatprep.subr.mxu0 0.0
  %101 = vmatpush1.msra.mxu0 %v75
  %102 = vmatprep.subr.mxu0 0.0
  %103 = vmatpush1.msra.mxu0 %v76
  %104 = vmatprep.subr.mxu0 0.0
  %105 = vmatpush1.msra.mxu0 %v77
  %106 = vmatprep.subr.mxu0 0.0
  %107 = vmatpush1.msra.mxu0 %v78
  %108 = vmatprep.subr.mxu0 0.0
  %109 = vmatpush1.msra.mxu0 %v79
  %110 = vmatprep.subr.mxu0 0.0
  %111 = vmatpush1.msra.mxu0 %v80
  %112 = vmatprep.subr.mxu0 0.0
  %113 = vmatpush1.msra.mxu0 %v81
  %114 = vmatprep.subr.mxu0 0.0
  %115 = vmatpush1.msra.mxu0 0.0
  %116 = vmatprep.subr.mxu0 0.0
  %117 = vmatpush1.msra.mxu0 0.0
  %118 = vmatprep.subr.mxu0 0.0
  %119 = vmatpush1.msra.mxu0 0.0
  %120 = vmatprep.subr.mxu0 0.0
  %121 = vmatpush1.msra.mxu0 0.0
  %122 = vmatprep.subr.mxu0 0.0
  %123 = vmatpush1.msra.mxu0 0.0
  %124 = vmatprep.subr.mxu0 0.0
  %125 = vmatpush1.msra.mxu0 0.0
  %126 = vmatprep.subr.mxu0 0.0
  %127 = vmatpush1.msra.mxu0 0.0
  %128 = vmatprep.subr.mxu0 0.0
  %129 = vmatpush1.msra.mxu0 0.0
  %130 = vmatprep.subr.mxu0 0.0
  %131 = vmatpush1.msra.mxu0 0.0
  %132 = vmatprep.subr.mxu0 0.0
  %133 = vmatpush1.msra.mxu0 0.0
  %134 = vmatprep.subr.mxu0 0.0
  %135 = vmatpush1.msra.mxu0 0.0
  %136 = vmatprep.subr.mxu0 0.0
  %137 = vmatpush1.msra.mxu0 0.0
  %138 = vmatprep.subr.mxu0 0.0
  %139 = vmatpush1.msra.mxu0 0.0
  %140 = vmatprep.subr.mxu0 0.0
  %141 = vmatpush1.msra.mxu0 0.0
  %142 = vmatprep.subr.mxu0 0.0
  %143 = vmatpush1.msra.mxu0 0.0
  %144 = vmatprep.subr.mxu0 0.0
  %145 = vmatpush1.msra.mxu0 0.0
  %146 = vmatprep.mubr.f32.mxu0 0.0
  %147 = vmatmul.mubr.f32.gmra.mrb[0].mxu0 %v50
  %v148 = vpop.f32.mrb[0].mxu0
  %v149 = vadd.f32 0.0, %v148
  %v150 = vpop.f32.mrb[0].mxu0
  %151 = vmatprep.mubr.f32.mxu0 0.0
  %152 = vmatmul.mubr.f32.gmra.mrb[0].mxu0 %v51
  %v153 = vpop.f32.mrb[0].mxu0
  %v154 = vadd.f32 0.0, %v153
  %v155 = vpop.f32.mrb[0].mxu0
  %156 = vmatprep.mubr.f32.mxu0 0.0
  %157 = vmatmul.mubr.f32.gmra.mrb[0].mxu0 %v52
  %v158 = vpop.f32.mrb[0].mxu0
  %v159 = vadd.f32 0.0, %v158
  %v160 = vpop.f32.mrb[0].mxu0
  %161 = vmatprep.mubr.f32.mxu0 0.0
  %162 = vmatmul.mubr.f32.gmra.mrb[0].mxu0 %v53
  %v163 = vpop.f32.mrb[0].mxu0
  %v164 = vadd.f32 0.0, %v163
  %v165 = vpop.f32.mrb[0].mxu0
  %166 = vmatprep.mubr.f32.mxu0 0.0
  %167 = vmatmul.mubr.f32.gmra.mrb[0].mxu0 %v54
  %v168 = vpop.f32.mrb[0].mxu0
  %v169 = vadd.f32 0.0, %v168
  %v170 = vpop.f32.mrb[0].mxu0
  %171 = vmatprep.mubr.f32.mxu0 0.0
  %172 = vmatmul.mubr.f32.gmra.mrb[0].mxu0 %v55
  %v173 = vpop.f32.mrb[0].mxu0
  %v174 = vadd.f32 0.0, %v173
  %v175 = vpop.f32.mrb[0].mxu0
  %176 = vmatprep.mubr.f32.mxu0 0.0
  %177 = vmatmul.mubr.f32.gmra.mrb[0].mxu0 %v56
  %v178 = vpop.f32.mrb[0].mxu0
  %v179 = vadd.f32 0.0, %v178
  %v180 = vpop.f32.mrb[0].mxu0
  %181 = vmatprep.mubr.f32.mxu0 0.0
  %182 = vmatmul.mubr.f32.gmra.mrb[0].mxu0 %v57
  %v183 = vpop.f32.mrb[0].mxu0
  %v184 = vadd.f32 0.0, %v183
  %v185 = vpop.f32.mrb[0].mxu0
  %186 = vmatprep.mubr.f32.mxu0 0.0
  %187 = vmatmul.mubr.f32.gmra.mrb[0].mxu0 %v58
  %v188 = vpop.f32.mrb[0].mxu0
  %v189 = vadd.f32 0.0, %v188
  %v190 = vpop.f32.mrb[0].mxu0
  %191 = vmatprep.mubr.f32.mxu0 0.0
  %192 = vmatmul.mubr.f32.gmra.mrb[0].mxu0 %v59
  %v193 = vpop.f32.mrb[0].mxu0
  %v194 = vadd.f32 0.0, %v193
  %v195 = vpop.f32.mrb[0].mxu0
  %196 = vmatprep.mubr.f32.mxu0 0.0
  %197 = vmatmul.mubr.f32.gmra.mrb[0].mxu0 %v60
  %v198 = vpop.f32.mrb[0].mxu0
  %v199 = vadd.f32 0.0, %v198
  %v200 = vpop.f32.mrb[0].mxu0
  %201 = vmatprep.mubr.f32.mxu0 0.0
  %202 = vmatmul.mubr.f32.gmra.mrb[0].mxu0 %v61
  %v203 = vpop.f32.mrb[0].mxu0
  %v204 = vadd.f32 0.0, %v203
  %v205 = vpop.f32.mrb[0].mxu0
  %206 = vmatprep.mubr.f32.mxu0 0.0
  %207 = vmatmul.mubr.f32.gmra.mrb[0].mxu0 %v62
  %v208 = vpop.f32.mrb[0].mxu0
  %v209 = vadd.f32 0.0, %v208
  %v210 = vpop.f32.mrb[0].mxu0
  %211 = vmatprep.mubr.f32.mxu0 0.0
  %212 = vmatmul.mubr.f32.gmra.mrb[0].mxu0 %v63
  %v213 = vpop.f32.mrb[0].mxu0
  %v214 = vadd.f32 0.0, %v213
  %v215 = vpop.f32.mrb[0].mxu0
  %216 = vmatprep.mubr.f32.mxu0 0.0
  %217 = vmatmul.mubr.f32.gmra.mrb[0].mxu0 %v64
  %v218 = vpop.f32.mrb[0].mxu0
  %v219 = vadd.f32 0.0, %v218
  %v220 = vpop.f32.mrb[0].mxu0
  %221 = vmatprep.mubr.f32.mxu0 0.0
  %222 = vmatmul.mubr.f32.gmra.mrb[0].mxu0 %v65
  %v223 = vpop.f32.mrb[0].mxu0
  %v224 = vadd.f32 0.0, %v223
  %v225 = vpop.f32.mrb[0].mxu0
  %226 = vdwg.mxu0
  %v227 = vadd.f32 %v34, %v149
  %v228 = vadd.f32 %v35, %v154
  %v229 = vadd.f32 %v36, %v159
  %v230 = vadd.f32 %v37, %v164
  %v231 = vadd.f32 %v38, %v169
  %v232 = vadd.f32 %v39, %v174
  %v233 = vadd.f32 %v40, %v179
  %v234 = vadd.f32 %v41, %v184
  %v235 = vadd.f32 %v42, %v189
  %v236 = vadd.f32 %v43, %v194
  %v237 = vadd.f32 %v44, %v199
  %v238 = vadd.f32 %v45, %v204
  %v239 = vadd.f32 %v46, %v209
  %v240 = vadd.f32 %v47, %v214
  %v241 = vadd.f32 %v48, %v219
  %v242 = vadd.f32 %v49, %v224
  %243 = vst [vmem:[#allocation2] sm:$0xff] %v227
  %244 = vst [vmem:[#allocation2 + $0x8] sm:$0xff] %v228
  %245 = vst [vmem:[#allocation2 + $0x10] sm:$0xff] %v229
  %246 = vst [vmem:[#allocation2 + $0x18] sm:$0xff] %v230
  %247 = vst [vmem:[#allocation2 + $0x20] sm:$0xff] %v231
  %248 = vst [vmem:[#allocation2 + $0x28] sm:$0xff] %v232
  %249 = vst [vmem:[#allocation2 + $0x30] sm:$0xff] %v233
  %250 = vst [vmem:[#allocation2 + $0x38] sm:$0xff] %v234
  %251 = vst [vmem:[#allocation2 + $0x40] sm:$0xff] %v235
  %252 = vst [vmem:[#allocation2 + $0x48] sm:$0xff] %v236
  %253 = vst [vmem:[#allocation2 + $0x50] sm:$0xff] %v237
  %254 = vst [vmem:[#allocation2 + $0x58] sm:$0xff] %v238
  %255 = vst [vmem:[#allocation2 + $0x60] sm:$0xff] %v239
  %256 = vst [vmem:[#allocation2 + $0x68] sm:$0xff] %v240
  %257 = vst [vmem:[#allocation2 + $0x70] sm:$0xff] %v241
  %258 = vst [vmem:[#allocation2 + $0x78] sm:$0xff] %v242
  // Predicated region
  $region18: #{mylinear_forward.1} parent=0 // pred_check
    %p259 = pneg %p14
  $region19: #{mylinear_forward.1} parent=0 // pred_check_branch
    %261 = sbr.rel (%p259) target = $region21
  $region20: #{mylinear_forward.1} parent=0 // pred_region
    %v262 = vld [vmem:[#allocation2] sm:$0xff]
    %v263 = vld [vmem:[#allocation2 + $0x8] sm:$0xff]
    %v264 = vld [vmem:[#allocation2 + $0x10] sm:$0xff]
    %v265 = vld [vmem:[#allocation2 + $0x18] sm:$0xff]
    %v266 = vld [vmem:[#allocation2 + $0x20] sm:$0xff]
    %v267 = vld [vmem:[#allocation2 + $0x28] sm:$0xff]
    %v268 = vld [vmem:[#allocation2 + $0x30] sm:$0xff]
    %v269 = vld [vmem:[#allocation2 + $0x38] sm:$0xff]
    %v270 = vld [vmem:[#allocation2 + $0x40] sm:$0xff]
    %v271 = vld [vmem:[#allocation2 + $0x48] sm:$0xff]
    %v272 = vld [vmem:[#allocation2 + $0x50] sm:$0xff]
    %v273 = vld [vmem:[#allocation2 + $0x58] sm:$0xff]
    %v274 = vld [vmem:[#allocation2 + $0x60] sm:$0xff]
    %v275 = vld [vmem:[#allocation2 + $0x68] sm:$0xff]
    %v276 = vld [vmem:[#allocation2 + $0x70] sm:$0xff]
    %v277 = vld [vmem:[#allocation2 + $0x78] sm:$0xff]
    %v278 = vld [vmem:[%s2] sm:$0x1]
    %v280 = vlaneseq
    %v281 = vshrl.u32 %v280, 7
    %v282 = vsub.s32 0, %v281
    %v283 = vrot.slane %v278, %v282
    %v285 = vadd.f32 %v262, %v283
    %v286 = vadd.f32 %v263, %v283
    %v287 = vadd.f32 %v264, %v283
    %v288 = vadd.f32 %v265, %v283
    %v289 = vadd.f32 %v266, %v283
    %v290 = vadd.f32 %v267, %v283
    %v291 = vadd.f32 %v268, %v283
    %v292 = vadd.f32 %v269, %v283
    %v293 = vadd.f32 %v270, %v283
    %v294 = vadd.f32 %v271, %v283
    %v295 = vadd.f32 %v272, %v283
    %v296 = vadd.f32 %v273, %v283
    %v297 = vadd.f32 %v274, %v283
    %v298 = vadd.f32 %v275, %v283
    %v299 = vadd.f32 %v276, %v283
    %v300 = vadd.f32 %v277, %v283
    %v301 = vmax.f32 %v285, 0.0
    %v302 = vmax.f32 %v286, 0.0
    %v303 = vmax.f32 %v287, 0.0
    %v304 = vmax.f32 %v288, 0.0
    %v305 = vmax.f32 %v289, 0.0
    %v306 = vmax.f32 %v290, 0.0
    %v307 = vmax.f32 %v291, 0.0
    %v308 = vmax.f32 %v292, 0.0
    %v309 = vmax.f32 %v293, 0.0
    %v310 = vmax.f32 %v294, 0.0
    %v311 = vmax.f32 %v295, 0.0
    %v312 = vmax.f32 %v296, 0.0
    %v313 = vmax.f32 %v297, 0.0
    %v314 = vmax.f32 %v298, 0.0
    %v315 = vmax.f32 %v299, 0.0
    %v316 = vmax.f32 %v300, 0.0
    %317 = vst [vmem:[%s3] sm:$0xff] %v301
    %318 = vst [vmem:[%s3 + $0x8] sm:$0xff] %v302
    %319 = vst [vmem:[%s3 + $0x10] sm:$0xff] %v303
    %320 = vst [vmem:[%s3 + $0x18] sm:$0xff] %v304
    %321 = vst [vmem:[%s3 + $0x20] sm:$0xff] %v305
    %322 = vst [vmem:[%s3 + $0x28] sm:$0xff] %v306
    %323 = vst [vmem:[%s3 + $0x30] sm:$0xff] %v307
    %324 = vst [vmem:[%s3 + $0x38] sm:$0xff] %v308
    %325 = vst [vmem:[%s3 + $0x40] sm:$0xff] %v309
    %326 = vst [vmem:[%s3 + $0x48] sm:$0xff] %v310
    %327 = vst [vmem:[%s3 + $0x50] sm:$0xff] %v311
    %328 = vst [vmem:[%s3 + $0x58] sm:$0xff] %v312
    %329 = vst [vmem:[%s3 + $0x60] sm:$0xff] %v313
    %330 = vst [vmem:[%s3 + $0x68] sm:$0xff] %v314
    %331 = vst [vmem:[%s3 + $0x70] sm:$0xff] %v315
    %332 = vst [vmem:[%s3 + $0x78] sm:$0xff] %v316
  $region21: #{mylinear_forward.1} parent=0 // pred_fallthru
    _
  // Predicated region
  $region22: #{mylinear_forward.1} parent=0 // pred_check
    _
  $region23: #{mylinear_forward.1} parent=0 // pred_check_branch
    %334 = sbr.rel (0) target = $region25
  $region24: #{mylinear_forward.1} parent=0 // pred_region
    _
  $region25: #{mylinear_forward.1} parent=0 // pred_fallthru
    _
  // Predicated region
  $region26: #{mylinear_forward.1} parent=0 // pred_check
    _
  $region27: #{mylinear_forward.1} parent=0 // pred_check_branch
    %336 = sbr.rel (0) target = $region29
  $region28: #{mylinear_forward.1} parent=0 // pred_region
    _
  $region29: #{mylinear_forward.1} parent=0 // pred_fallthru
    _

</llo_original>
